<compile_context>
chip_gen: v7x
topology: tpu7x:2x2x1
jax: 0.10.0
libtpu: 0.0.40
codegen_flags: <defaults>
</compile_context>

<pallas_src>
import numpy as np
import jax
import jax.numpy as jnp
from jax.experimental import pallas as pl
from jax.experimental.pallas import tpu as pltpu


# ----------------------------------------------------------------------------
# Shape arithmetic (pure Python, identical semantics to the PyTorch helper).
# ----------------------------------------------------------------------------
def reshape_helper(orig_dims, reshape_dims, axis=0, num_axes=-1):
    if num_axes == -1:
        num_axes = len(orig_dims[axis:])
    end_axis = axis + num_axes
    new_dims = list(orig_dims[:axis])
    cur = 1
    infer_axis = -1
    for idx, d in enumerate(reshape_dims):
        if d == 0:
            d = orig_dims[axis + idx]
        elif d < 0:
            assert infer_axis < 0, 'Cannot infer both axis: {} and axis: {}'.format(infer_axis, idx)
            infer_axis = idx
        new_dims.append(d)
        if d > 0:
            cur *= d
    if infer_axis >= 0:
        count = np.prod(orig_dims[axis:end_axis])
        d = int(count / cur)
        new_dims[infer_axis] = d
    new_dims += list(orig_dims[end_axis:])
    assert np.prod(orig_dims) == np.prod(new_dims), \
        'Reshape: shape count: {} != {}'.format(orig_dims, new_dims)
    return [int(d) for d in new_dims]


# ----------------------------------------------------------------------------
# Pallas copy kernel: materializes a contiguous copy of the flattened data.
# ----------------------------------------------------------------------------
def _copy_kernel(x_ref, o_ref):
    o_ref[...] = x_ref[...]


def _sublane_multiple(dtype):
    """Sublane packing multiple: 8 for 32-bit, 16 for 16-bit, 32 for 8-bit."""
    itemsize = np.dtype(dtype).itemsize
    return max(8, 32 // itemsize)


def _contiguous_copy_flat(x_flat):
    """Contiguous copy of a 1D array via a tiled, lane-dense Pallas copy."""
    n = int(x_flat.shape[0])
    dtype = x_flat.dtype
    itemsize = np.dtype(dtype).itemsize
    sub = _sublane_multiple(dtype)
    total_bytes = n * itemsize

    # ~4 MiB blocks: with double-buffered input + output that is <= 16 MiB of
    # VMEM, which fits every generation (incl. v7x's 64 MiB physical VMEM).
    target_block_bytes = 4 << 20

    if total_bytes <= target_block_bytes:
        # Small input: one lane-dense block covering the (minimally padded)
        # array. Second-to-last dim = sublane multiple, last dim = k * 128.
        g = sub * 128
        n_pad = ((n + g - 1) // g) * g
        rows, cols = sub, n_pad // sub
        block = (rows, cols)
        grid = (1,)
    else:
        # Large input: wide lane dim (1024) + multi-MiB blocks. Pad up to a
        # whole number of blocks; block size is capped so the pad overhead is
        # bounded (<= ~1/16 of the tensor) and at most 4 MiB.
        lane = 1024
        block_bytes = min(target_block_bytes,
                          max(sub * lane * itemsize,
                              pl.next_power_of_2(total_bytes) // 16))
        block_rows = max(sub, (block_bytes // (lane * itemsize)) // sub * sub)
        block_elems = block_rows * lane
        n_pad = ((n + block_elems - 1) // block_elems) * block_elems
        rows, cols = n_pad // lane, lane
        block = (block_rows, lane)
        grid = (rows // block_rows,)

    x_pad = x_flat if n_pad == n else jnp.pad(x_flat, (0, n_pad - n))
    x2d = jnp.reshape(x_pad, (rows, cols))

    out2d = pl.pallas_call(
        _copy_kernel,
        out_shape=jax.ShapeDtypeStruct((rows, cols), dtype),
        grid_spec=pltpu.PrefetchScalarGridSpec(
            num_scalar_prefetch=0,
            grid=grid,
            in_specs=[pl.BlockSpec(block, lambda i: (i, 0))],
            out_specs=pl.BlockSpec(block, lambda i: (i, 0)),
        ),
        compiler_params=pltpu.CompilerParams(
            dimension_semantics=("parallel",),   # lets v7x shard across 2 TCs
            vmem_limit_bytes=32 << 20,           # >= v5e's 16 MiB default; our
                                                 # worst case is ~16 MiB
        ),
    )(x2d)

    out_flat = jnp.reshape(out2d, (n_pad,))
    if n_pad != n:
        out_flat = out_flat[:n]
    return out_flat


# ----------------------------------------------------------------------------
# Module wrapper
# ----------------------------------------------------------------------------
class Reshape:
    """JAX/Pallas equivalent of mtorch.reshape.Reshape (no parameters)."""

    def __init__(self, dims, axis=0, num_axes=-1):
        self.dims = dims
        self.axis = axis
        self.num_axes = num_axes

    def __call__(self, x):
        new_dims = reshape_helper(x.shape, self.dims,
                                  axis=self.axis, num_axes=self.num_axes)
        n = int(np.prod(x.shape))
        x_flat = jnp.reshape(x, (n,))            # metadata only (glue)
        out_flat = _contiguous_copy_flat(x_flat)  # Pallas contiguous copy
        return jnp.reshape(out_flat, new_dims)   # metadata only (glue)


if __name__ == "__main__":
    key = jax.random.PRNGKey(0)

    # NCHW-shaped input, as the PyTorch module would typically see.
    x = jax.random.normal(key, (2, 4, 16, 16), dtype=jnp.float32)

    # Caffe-style reshape: keep batch dim, flatten the rest -> (2, 1024)
    mod = Reshape(dims=[0, -1], axis=0, num_axes=-1)
    y = mod(x)
    jax.block_until_ready(y)

    expected_shape = tuple(reshape_helper(x.shape, [0, -1], axis=0, num_axes=-1))
    assert y.shape == expected_shape, (y.shape, expected_shape)
    np.testing.assert_allclose(np.asarray(y),
                               np.asarray(x).reshape(expected_shape),
                               rtol=0, atol=0)

    # Extra check: size not divisible by 128 exercises the pad + trim path.
    x2 = jax.random.normal(jax.random.PRNGKey(1), (3, 5, 7), dtype=jnp.float32)
    mod2 = Reshape(dims=[-1], axis=0, num_axes=-1)
    y2 = mod2(x2)
    jax.block_until_ready(y2)
    assert y2.shape == (105,), y2.shape
    np.testing.assert_allclose(np.asarray(y2),
                               np.asarray(x2).reshape(105),
                               rtol=0, atol=0)

    print("KERNEL_OK")
</pallas_src>

<mosaic_0001>
module attributes {stable_mosaic.version = 11 : i64} {
  func.func @_copy_kernel(%arg0: i32, %arg1: memref<8x256xf32, #tpu.memory_space<vmem>>, %arg2: memref<8x256xf32, #tpu.memory_space<vmem>>) attributes {dimension_semantics = [#tpu.dimension_semantics<parallel>], iteration_bounds = array<i64: 1>, scalar_prefetch = 0 : i64, scratch_operands = 0 : i64, tpu.core_type = #tpu.core_type<tc>, window_params = [{transform_indices = @transform_0, window_bounds = array<i64: 8, 256>}, {transform_indices = @transform_1, window_bounds = array<i64: 8, 256>}]} {
    %c0 = arith.constant 0 : index
    %c0_0 = arith.constant 0 : index
    %0 = vector.load %arg1[%c0, %c0_0] : memref<8x256xf32, #tpu.memory_space<vmem>>, vector<8x256xf32>
    %c0_1 = arith.constant 0 : index
    %c0_2 = arith.constant 0 : index
    %1 = vector.load %arg2[%c0_1, %c0_2] : memref<8x256xf32, #tpu.memory_space<vmem>>, vector<8x256xf32>
    tpu.vector_store %arg2[%c0_1, %c0_2], %0 {strides = array<i32>} : memref<8x256xf32, #tpu.memory_space<vmem>>, vector<8x256xf32>,
    return
  }
  func.func @transform_0(%arg0: i32) -> (i32, i32) {
    %c0_i32 = arith.constant 0 : i32
    %c0_i32_0 = arith.constant 0 : i32
    return %arg0, %c0_i32 : i32, i32
  }
  func.func @transform_1(%arg0: i32) -> (i32, i32) {
    %c0_i32 = arith.constant 0 : i32
    %c0_i32_0 = arith.constant 0 : i32
    return %arg0, %c0_i32 : i32, i32
  }
}

</mosaic_0001>

<llo_original>
// kernel: tpu_custom_call.1
$region0: #{tpu_custom_call.1}
  #allocation0 [shape = 'u32[]', space=smem, size = 0x4, offset = 0x4, fixed_abs, tag = 'smem constant byte address 0x4 - core index']
  #allocation1 [shape = 'u32[144,128]{1,0:T(1,128)}', space=vmem, size = 0x12000, scoped, tag = 'internal scratch']
  %s0 = inlined_call_operand.hbm [shape: f32[8,256], index: 0, kind: input, shape index: {}]
  %s1 = inlined_call_operand.hbm [shape: f32[8,256], index: 1, kind: output, shape index: {}]
  %s2 = sld [smem:[#allocation0]]
  $region18: #{tpu_custom_call.1} parent=0
    _
  %s4 = ssub.s32 1, %s2
  %s5 = scalar_select 0, %s4, %s2
  $region1: #{tpu_custom_call.1} parent=0
    #allocation2 [shape = 'u8[8192]{0}', space=vmem, size = 0x2000, scoped, tag = 'input window, operand 0, single buffered']
    #allocation3 [shape = 's32[1]{0}', space=sflag, size = 0x4, scoped, tag = 'scoped memory for tpu_custom_call.1']
    #allocation4 [shape = 's32[1]{0}', space=sflag, size = 0x4, scoped, tag = 'scoped memory for tpu_custom_call.1']
    #allocation5 [shape = 'u8[8192]{0}', space=vmem, size = 0x2000, scoped, tag = 'output window, operand 0, single buffered']
    %6 = vsyncpa [#allocation3], 0
    %7 = vsyncpa [#allocation4], 0
    // Predicated region
    $region2: #{tpu_custom_call.1} parent=1 // pred_check
      _
    $region3: #{tpu_custom_call.1} parent=1 // pred_check_branch
      %9 = sbr.rel (0) target = $region5
    $region4: #{tpu_custom_call.1} parent=1 // pred_region
      %s11 = ssub.s32 256, 256
      %12 = vsyncadd [#allocation3], %s11
      %s14 = sshll.u32 [#allocation2], 4
      %s15 = int_to_ptr.vmem [resolvable:$true] %s14
      %17 = dma.hbm_to_vmem [thread:$0]  %s0, 256, %s15, [#allocation3]
    $region5: #{tpu_custom_call.1} parent=1 // pred_fallthru
      _
    // Predicated region
    $region6: #{tpu_custom_call.1} parent=1 // pred_check
      _
    $region7: #{tpu_custom_call.1} parent=1 // pred_check_branch
      %19 = sbr.rel (0) target = $region9
    $region8: #{tpu_custom_call.1} parent=1 // pred_region
      %20 = dma.done [#allocation3], 256
    $region9: #{tpu_custom_call.1} parent=1 // pred_fallthru
      _
    %v21 = vld [vmem:[#allocation2] sm:$0xff]
    %v22 = vld [vmem:[#allocation2 + $0x8] sm:$0xff]
    %23 = vst [vmem:[#allocation5] sm:$0xff] %v21
    %24 = vst [vmem:[#allocation5 + $0x8] sm:$0xff] %v22
    // Predicated region
    $region10: #{tpu_custom_call.1} parent=1 // pred_check
      _
    $region11: #{tpu_custom_call.1} parent=1 // pred_check_branch
      %26 = sbr.rel (0) target = $region13
    $region12: #{tpu_custom_call.1} parent=1 // pred_region
      %s28 = ssub.s32 256, 256
      %29 = vsyncadd [#allocation4], %s28
      %s31 = sshll.u32 [#allocation5], 4
      %s32 = int_to_ptr.vmem [resolvable:$true] %s31
      %34 = dma.vmem_to_hbm [thread:$0]  %s32, 256, %s1, [#allocation4]
    $region13: #{tpu_custom_call.1} parent=1 // pred_fallthru
      _
    // Predicated region
    $region14: #{tpu_custom_call.1} parent=1 // pred_check
      _
    $region15: #{tpu_custom_call.1} parent=1 // pred_check_branch
      %36 = sbr.rel (0) target = $region17
    $region16: #{tpu_custom_call.1} parent=1 // pred_region
      %37 = dma.done [#allocation4], 256
    $region17: #{tpu_custom_call.1} parent=1 // pred_fallthru
      _
    %38 = vsyncpa [#allocation3], 1
    %39 = vsyncpa [#allocation4], 1

</llo_original>
